<compile_context>
chip_gen: v5e
topology: v5e:2x2
jax: 0.10.0
libtpu: 0.0.40
codegen_flags: <defaults>
</compile_context>

<pallas_src>
import jax
import jax.numpy as jnp
import numpy as np
from jax.experimental import pallas as pl
from jax.experimental.pallas import tpu as pltpu


def _per_head_kernel(x_ref, w_ref, b_ref, o_ref):
    # x_ref: (tb, N, H)  w_ref: (N, H, O)  b_ref: (N, 1, O)  o_ref: (tb, N*O)
    num_heads = w_ref.shape[0]
    ys = []
    for i in range(num_heads):                        # static unroll over heads
        xi = x_ref[:, i, :]                           # (tb, H) per-head slice
        y = jnp.dot(xi, w_ref[i], preferred_element_type=jnp.float32)
        ys.append(y + b_ref[i])                       # f32 bias add
    out = jnp.concatenate(ys, axis=-1)                # (tb, N*O), one wide slab
    o_ref[...] = out.astype(o_ref.dtype)              # single lane-dense store


def _shared_kernel(x_ref, w_ref, b_ref, o_ref):
    # x_ref: (tb, H)  w_ref: (H, N*O)  b_ref: (1, N*O)  o_ref: (tb, N*O)
    y = jnp.dot(x_ref[...], w_ref[...], preferred_element_type=jnp.float32)
    o_ref[...] = (y + b_ref[...]).astype(o_ref.dtype)


def separated_head_forward(x, weights, biases):
    """SeparatedHead forward.

    Args:
      x:       [B, num_heads, H] (per-head inputs) or [B, H] (shared input).
      weights: [num_heads, H, O]  (head i's Linear weight, pre-transposed so
                                   y = x @ W + b).
      biases:  [num_heads, O]
    Returns:
      [B, num_heads * O]  -- per-head outputs concatenated along dim=1.
    """
    num_heads, H, O = weights.shape
    B = x.shape[0]
    out_total = num_heads * O

    # B tiling: one step for small B, 512-row tiles for large B.
    tile_b = B if B <= 512 else 512
    grid = (pl.cdiv(B, tile_b),)
    o_spec = pl.BlockSpec((tile_b, out_total), lambda i: (i, 0))

    if x.ndim == 3:
        kernel = _per_head_kernel
        args = (x, weights, biases.reshape(num_heads, 1, O))
        in_specs = [
            pl.BlockSpec((tile_b, num_heads, H), lambda i: (i, 0, 0)),
            pl.BlockSpec((num_heads, H, O), lambda i: (0, 0, 0)),   # resident
            pl.BlockSpec((num_heads, 1, O), lambda i: (0, 0, 0)),   # resident
        ]
    else:
        kernel = _shared_kernel
        # Fuse the N head Linears into one [H, N*O] matmul (layout plumbing on
        # tiny weight tensors; output slab is already in concatenated order).
        w_cat = jnp.transpose(weights, (1, 0, 2)).reshape(H, out_total)
        b_cat = biases.reshape(1, out_total)
        args = (x, w_cat, b_cat)
        in_specs = [
            pl.BlockSpec((tile_b, H), lambda i: (i, 0)),
            pl.BlockSpec((H, out_total), lambda i: (0, 0)),         # resident
            pl.BlockSpec((1, out_total), lambda i: (0, 0)),         # resident
        ]

    return pl.pallas_call(
        kernel,
        out_shape=jax.ShapeDtypeStruct((B, out_total), x.dtype),
        grid=grid,
        in_specs=in_specs,
        out_specs=o_spec,
        compiler_params=pltpu.CompilerParams(
            dimension_semantics=("parallel",)),
    )(*args)


if __name__ == "__main__":
    B, NUM_HEADS, H, O = 8, 3, 32, 16

    key = jax.random.PRNGKey(0)
    kx, kw, kb = jax.random.split(key, 3)

    # Deterministic synthetic parameters (shapes implied by Linear heads).
    x = jax.random.normal(kx, (B, NUM_HEADS, H), dtype=jnp.float32)
    weights = 0.1 * jax.random.normal(kw, (NUM_HEADS, H, O), dtype=jnp.float32)
    biases = 0.1 * jax.random.normal(kb, (NUM_HEADS, O), dtype=jnp.float32)

    # 3-D (per-head input) branch.
    out = jax.block_until_ready(separated_head_forward(x, weights, biases))
    ref = (jnp.einsum("bnh,nho->bno", x, weights) + biases[None]).reshape(
        B, NUM_HEADS * O)
    np.testing.assert_allclose(np.asarray(out), np.asarray(ref),
                               rtol=1e-5, atol=1e-5)

    # 2-D (shared-input) branch.
    x2 = jax.random.normal(kx, (B, H), dtype=jnp.float32)
    out2 = jax.block_until_ready(separated_head_forward(x2, weights, biases))
    ref2 = (jnp.einsum("bh,nho->bno", x2, weights) + biases[None]).reshape(
        B, NUM_HEADS * O)
    np.testing.assert_allclose(np.asarray(out2), np.asarray(ref2),
                               rtol=1e-5, atol=1e-5)

    print("KERNEL_OK")
</pallas_src>

<mosaic_0001>
module attributes {stable_mosaic.version = 11 : i64} {
  func.func @_per_head_kernel(%arg0: i32, %arg1: memref<8x3x32xf32, #tpu.memory_space<vmem>>, %arg2: memref<3x32x16xf32, #tpu.memory_space<vmem>>, %arg3: memref<3x1x16xf32, #tpu.memory_space<vmem>>, %arg4: memref<8x48xf32, #tpu.memory_space<vmem>>) attributes {dimension_semantics = [#tpu.dimension_semantics<parallel>], iteration_bounds = array<i64: 1>, scalar_prefetch = 0 : i64, scratch_operands = 0 : i64, tpu.core_type = #tpu.core_type<tc>, window_params = [{transform_indices = @transform_0, window_bounds = array<i64: 8, 3, 32>}, {pipeline_mode = #tpu.pipeline_mode<synchronous>, transform_indices = @transform_1, window_bounds = array<i64: 3, 32, 16>}, {pipeline_mode = #tpu.pipeline_mode<synchronous>, transform_indices = @transform_2, window_bounds = array<i64: 3, 1, 16>}, {transform_indices = @transform_3, window_bounds = array<i64: 8, 48>}]} {
    %c0 = arith.constant 0 : index
    %c0_0 = arith.constant 0 : index
    %c0_1 = arith.constant 0 : index
    %0 = vector.load %arg1[%c0, %c0_0, %c0_1] : memref<8x3x32xf32, #tpu.memory_space<vmem>>, vector<8x1x32xf32>
    %1 = vector.shape_cast %0 : vector<8x1x32xf32> to vector<8x32xf32>
    %c0_2 = arith.constant 0 : index
    %c0_3 = arith.constant 0 : index
    %c0_4 = arith.constant 0 : index
    %2 = vector.load %arg2[%c0_2, %c0_3, %c0_4] : memref<3x32x16xf32, #tpu.memory_space<vmem>>, vector<1x32x16xf32>
    %3 = vector.shape_cast %2 : vector<1x32x16xf32> to vector<32x16xf32>
    %cst = arith.constant dense<0.000000e+00> : vector<8x16xf32>
    %4 = tpu.matmul %1, %3, %cst {dimension_numbers = #tpu.dot_dimension_numbers<[1], [0], [0], [1], [0, 0, 1, 1], [], []>} : vector<8x32xf32>, vector<32x16xf32>, vector<8x16xf32> -> vector<8x16xf32>
    %c0_5 = arith.constant 0 : index
    %c0_6 = arith.constant 0 : index
    %c0_7 = arith.constant 0 : index
    %5 = vector.load %arg3[%c0_5, %c0_6, %c0_7] : memref<3x1x16xf32, #tpu.memory_space<vmem>>, vector<1x1x16xf32>
    %6 = vector.shape_cast %5 : vector<1x1x16xf32> to vector<1x16xf32>
    %7 = vector.broadcast %6 : vector<1x16xf32> to vector<8x16xf32>
    %8 = arith.addf %4, %7 : vector<8x16xf32>
    %c0_8 = arith.constant 0 : index
    %c1 = arith.constant 1 : index
    %c0_9 = arith.constant 0 : index
    %9 = vector.load %arg1[%c0_8, %c1, %c0_9] : memref<8x3x32xf32, #tpu.memory_space<vmem>>, vector<8x1x32xf32>
    %10 = vector.shape_cast %9 : vector<8x1x32xf32> to vector<8x32xf32>
    %c1_10 = arith.constant 1 : index
    %c0_11 = arith.constant 0 : index
    %c0_12 = arith.constant 0 : index
    %11 = vector.load %arg2[%c1_10, %c0_11, %c0_12] : memref<3x32x16xf32, #tpu.memory_space<vmem>>, vector<1x32x16xf32>
    %12 = vector.shape_cast %11 : vector<1x32x16xf32> to vector<32x16xf32>
    %cst_13 = arith.constant dense<0.000000e+00> : vector<8x16xf32>
    %13 = tpu.matmul %10, %12, %cst_13 {dimension_numbers = #tpu.dot_dimension_numbers<[1], [0], [0], [1], [0, 0, 1, 1], [], []>} : vector<8x32xf32>, vector<32x16xf32>, vector<8x16xf32> -> vector<8x16xf32>
    %c1_14 = arith.constant 1 : index
    %c0_15 = arith.constant 0 : index
    %c0_16 = arith.constant 0 : index
    %14 = vector.load %arg3[%c1_14, %c0_15, %c0_16] : memref<3x1x16xf32, #tpu.memory_space<vmem>>, vector<1x1x16xf32>
    %15 = vector.shape_cast %14 : vector<1x1x16xf32> to vector<1x16xf32>
    %16 = vector.broadcast %15 : vector<1x16xf32> to vector<8x16xf32>
    %17 = arith.addf %13, %16 : vector<8x16xf32>
    %c0_17 = arith.constant 0 : index
    %c2 = arith.constant 2 : index
    %c0_18 = arith.constant 0 : index
    %18 = vector.load %arg1[%c0_17, %c2, %c0_18] : memref<8x3x32xf32, #tpu.memory_space<vmem>>, vector<8x1x32xf32>
    %19 = vector.shape_cast %18 : vector<8x1x32xf32> to vector<8x32xf32>
    %c2_19 = arith.constant 2 : index
    %c0_20 = arith.constant 0 : index
    %c0_21 = arith.constant 0 : index
    %20 = vector.load %arg2[%c2_19, %c0_20, %c0_21] : memref<3x32x16xf32, #tpu.memory_space<vmem>>, vector<1x32x16xf32>
    %21 = vector.shape_cast %20 : vector<1x32x16xf32> to vector<32x16xf32>
    %cst_22 = arith.constant dense<0.000000e+00> : vector<8x16xf32>
    %22 = tpu.matmul %19, %21, %cst_22 {dimension_numbers = #tpu.dot_dimension_numbers<[1], [0], [0], [1], [0, 0, 1, 1], [], []>} : vector<8x32xf32>, vector<32x16xf32>, vector<8x16xf32> -> vector<8x16xf32>
    %c2_23 = arith.constant 2 : index
    %c0_24 = arith.constant 0 : index
    %c0_25 = arith.constant 0 : index
    %23 = vector.load %arg3[%c2_23, %c0_24, %c0_25] : memref<3x1x16xf32, #tpu.memory_space<vmem>>, vector<1x1x16xf32>
    %24 = vector.shape_cast %23 : vector<1x1x16xf32> to vector<1x16xf32>
    %25 = vector.broadcast %24 : vector<1x16xf32> to vector<8x16xf32>
    %26 = arith.addf %22, %25 : vector<8x16xf32>
    %27 = tpu.concatenate %8, %17, %26 in 1 : vector<8x16xf32>, vector<8x16xf32>, vector<8x16xf32> -> vector<8x48xf32>
    %c0_26 = arith.constant 0 : index
    %c0_27 = arith.constant 0 : index
    %28 = vector.load %arg4[%c0_26, %c0_27] : memref<8x48xf32, #tpu.memory_space<vmem>>, vector<8x48xf32>
    tpu.vector_store %arg4[%c0_26, %c0_27], %27 {strides = array<i32>} : memref<8x48xf32, #tpu.memory_space<vmem>>, vector<8x48xf32>,
    return
  }
  func.func @transform_0(%arg0: i32) -> (i32, i32, i32) {
    %c0_i32 = arith.constant 0 : i32
    %c0_i32_0 = arith.constant 0 : i32
    %c0_i32_1 = arith.constant 0 : i32
    return %arg0, %c0_i32, %c0_i32_0 : i32, i32, i32
  }
  func.func @transform_1(%arg0: i32) -> (i32, i32, i32) {
    %c0_i32 = arith.constant 0 : i32
    %c0_i32_0 = arith.constant 0 : i32
    %c0_i32_1 = arith.constant 0 : i32
    %c0_i32_2 = arith.constant 0 : i32
    return %c0_i32, %c0_i32_0, %c0_i32_1 : i32, i32, i32
  }
  func.func @transform_2(%arg0: i32) -> (i32, i32, i32) {
    %c0_i32 = arith.constant 0 : i32
    %c0_i32_0 = arith.constant 0 : i32
    %c0_i32_1 = arith.constant 0 : i32
    %c0_i32_2 = arith.constant 0 : i32
    return %c0_i32, %c0_i32_0, %c0_i32_1 : i32, i32, i32
  }
  func.func @transform_3(%arg0: i32) -> (i32, i32) {
    %c0_i32 = arith.constant 0 : i32
    %c0_i32_0 = arith.constant 0 : i32
    return %arg0, %c0_i32 : i32, i32
  }
}

</mosaic_0001>

<llo_original>
// kernel: tpu_custom_call.1
$region0: #{tpu_custom_call.1}
  #allocation0 [shape = 'u32[]', space=smem, size = 0x4, offset = 0x4, fixed_abs, tag = 'smem constant byte address 0x4 - core index']
  #allocation1 [shape = 'u32[72,128]{1,0:T(1,128)}', space=vmem, size = 0x9000, scoped, tag = 'internal scratch']
  %s0 = inlined_call_operand.vmem [shape: f32[8,3,32], index: 0, kind: input, shape index: {}]
  %s1 = inlined_call_operand.vmem [shape: f32[3,32,16], index: 1, kind: input, shape index: {}]
  %s2 = inlined_call_operand.vmem [shape: f32[3,1,16], index: 2, kind: input, shape index: {}]
  %s3 = inlined_call_operand.hbm [shape: f32[8,48], index: 3, kind: output, shape index: {}]
  %s4 = sld [smem:[#allocation0]]
  $region22: #{tpu_custom_call.1} parent=0
    _
  %s6 = ssub.s32 1, %s4
  %s7 = scalar_select 0, %s6, %s4
  $region1: #{tpu_custom_call.1} parent=0
    #allocation2 [shape = 'u8[4096]{0}', space=vmem, size = 0x1000, scoped, tag = 'output window, operand 0, single buffered']
    #allocation3 [shape = 's32[1]{0}', space=sflag, size = 0x4, scoped, tag = 'scoped memory for tpu_custom_call.1']
    %8 = vsyncpa [#allocation3], 0
    // Predicated region
    $region2: #{tpu_custom_call.1} parent=1 // pred_check
      _
    $region3: #{tpu_custom_call.1} parent=1 // pred_check_branch
      %10 = sbr.rel (0) target = $region5
    $region4: #{tpu_custom_call.1} parent=1 // pred_region
      _
    $region5: #{tpu_custom_call.1} parent=1 // pred_fallthru
      _
    // Predicated region
    $region6: #{tpu_custom_call.1} parent=1 // pred_check
      _
    $region7: #{tpu_custom_call.1} parent=1 // pred_check_branch
      %12 = sbr.rel (0) target = $region9
    $region8: #{tpu_custom_call.1} parent=1 // pred_region
      _
    $region9: #{tpu_custom_call.1} parent=1 // pred_fallthru
      _
    // Predicated region
    $region10: #{tpu_custom_call.1} parent=1 // pred_check
      _
    $region11: #{tpu_custom_call.1} parent=1 // pred_check_branch
      %14 = sbr.rel (0) target = $region13
    $region12: #{tpu_custom_call.1} parent=1 // pred_region
      _
    $region13: #{tpu_custom_call.1} parent=1 // pred_fallthru
      _
    %v15 = vld [vmem:[%s0] sm:$0x1]
    %v16 = vld [vmem:[%s0 + $0x4] sm:$0x1]
    %v17 = vld [vmem:[%s0 + $0x8] sm:$0x1]
    %v18 = vld [vmem:[%s0 + $0xc] sm:$0x1]
    %v19 = vld [vmem:[%s0 + $0x10] sm:$0x1]
    %v20 = vld [vmem:[%s0 + $0x14] sm:$0x1]
    %v21 = vld [vmem:[%s0 + $0x18] sm:$0x1]
    %v22 = vld [vmem:[%s0 + $0x1c] sm:$0x1]
    %v23 = vld [vmem:[%s1] sm:$0xff]
    %v24 = vld [vmem:[%s1 + $0x8] sm:$0xff]
    %v25 = vld [vmem:[%s1 + $0x10] sm:$0xff]
    %v26 = vld [vmem:[%s1 + $0x18] sm:$0xff]
    %v27 = vld [vmem:[%s2] sm:$0x1]
    %v29 = vperm.slane %v27, 0
    %v39 = vrot.slane %v16, 7
    %vm40 = vcmask 1041409
    %v41 = vsel %vm40, %v39, %v15
    %v42 = vrot.slane %v17, 6
    %vm43 = vcmask 1042434
    %v44 = vsel %vm43, %v42, %v41
    %v45 = vrot.slane %v18, 5
    %vm46 = vcmask 1043459
    %v47 = vsel %vm46, %v45, %v44
    %v48 = vrot.slane %v19, 4
    %vm49 = vcmask 1044484
    %v50 = vsel %vm49, %v48, %v47
    %v51 = vrot.slane %v20, 3
    %vm52 = vcmask 1045509
    %v53 = vsel %vm52, %v51, %v50
    %v54 = vrot.slane %v21, 2
    %vm55 = vcmask 1046534
    %v56 = vsel %vm55, %v54, %v53
    %v57 = vrot.slane %v22, 1
    %vm58 = vcmask 1047559
    %v59 = vsel %vm58, %v57, %v56
    %vm60 = vcmask 261120
    %v61 = vsel %vm60, %v59, 0
    %63 = vmatpush.msra.mxu0 0.0
    %64 = vmatpush.msra.mxu0 0.0
    %65 = vmatpush.msra.mxu0 0.0
    %66 = vmatpush.msra.mxu0 0.0
    %67 = vmatpush.msra.mxu0 0.0
    %68 = vmatpush.msra.mxu0 0.0
    %69 = vmatpush.msra.mxu0 0.0
    %70 = vmatpush.msra.mxu0 0.0
    %71 = vmatpush.msra.mxu0 0.0
    %72 = vmatpush.msra.mxu0 0.0
    %73 = vmatpush.msra.mxu0 0.0
    %74 = vmatpush.msra.mxu0 0.0
    %75 = vmatpush.msra.mxu0 %v26
    %76 = vmatpush.msra.mxu0 %v25
    %77 = vmatpush.msra.mxu0 %v24
    %78 = vmatpush.msra.mxu0 %v23
    %79 = vmatmul.f32.gmra.mxu0 %v61
    %v80 = vpop.f32.mrf.mxu0
    %v81 = vadd.f32 %v29, %v80
    %82 = vdwg.mxu0
    %v83 = vld [vmem:[%s0 + $0x1] sm:$0x1]
    %v84 = vld [vmem:[%s0 + $0x5] sm:$0x1]
    %v85 = vld [vmem:[%s0 + $0x9] sm:$0x1]
    %v86 = vld [vmem:[%s0 + $0xd] sm:$0x1]
    %v87 = vld [vmem:[%s0 + $0x11] sm:$0x1]
    %v88 = vld [vmem:[%s0 + $0x15] sm:$0x1]
    %v89 = vld [vmem:[%s0 + $0x19] sm:$0x1]
    %v90 = vld [vmem:[%s0 + $0x1d] sm:$0x1]
    %s91 = scalar_lea.vmem %s1, 32
    %v92 = vld [vmem:[%s91] sm:$0xff]
    %v93 = vld [vmem:[%s91 + $0x8] sm:$0xff]
    %v94 = vld [vmem:[%s91 + $0x10] sm:$0xff]
    %v95 = vld [vmem:[%s91 + $0x18] sm:$0xff]
    %s96 = scalar_lea.vmem %s2, 1
    %v97 = vld [vmem:[%s96] sm:$0x1]
    %v99 = vperm.slane %v97, 0
    %v109 = vrot.slane %v84, 7
    %v110 = vsel %vm40, %v109, %v83
    %v111 = vrot.slane %v85, 6
    %v112 = vsel %vm43, %v111, %v110
    %v113 = vrot.slane %v86, 5
    %v114 = vsel %vm46, %v113, %v112
    %v115 = vrot.slane %v87, 4
    %v116 = vsel %vm49, %v115, %v114
    %v117 = vrot.slane %v88, 3
    %v118 = vsel %vm52, %v117, %v116
    %v119 = vrot.slane %v89, 2
    %v120 = vsel %vm55, %v119, %v118
    %v121 = vrot.slane %v90, 1
    %v122 = vsel %vm58, %v121, %v120
    %v123 = vsel %vm60, %v122, 0
    %125 = vmatpush.msra.mxu0 0.0
    %126 = vmatpush.msra.mxu0 0.0
    %127 = vmatpush.msra.mxu0 0.0
    %128 = vmatpush.msra.mxu0 0.0
    %129 = vmatpush.msra.mxu0 0.0
    %130 = vmatpush.msra.mxu0 0.0
    %131 = vmatpush.msra.mxu0 0.0
    %132 = vmatpush.msra.mxu0 0.0
    %133 = vmatpush.msra.mxu0 0.0
    %134 = vmatpush.msra.mxu0 0.0
    %135 = vmatpush.msra.mxu0 0.0
    %136 = vmatpush.msra.mxu0 0.0
    %137 = vmatpush.msra.mxu0 %v95
    %138 = vmatpush.msra.mxu0 %v94
    %139 = vmatpush.msra.mxu0 %v93
    %140 = vmatpush.msra.mxu0 %v92
    %141 = vmatmul.f32.gmra.mxu0 %v123
    %v142 = vpop.f32.mrf.mxu0
    %v143 = vadd.f32 %v99, %v142
    %144 = vdwg.mxu0
    %v145 = vld [vmem:[%s0 + $0x2] sm:$0x1]
    %v146 = vld [vmem:[%s0 + $0x6] sm:$0x1]
    %v147 = vld [vmem:[%s0 + $0xa] sm:$0x1]
    %v148 = vld [vmem:[%s0 + $0xe] sm:$0x1]
    %v149 = vld [vmem:[%s0 + $0x12] sm:$0x1]
    %v150 = vld [vmem:[%s0 + $0x16] sm:$0x1]
    %v151 = vld [vmem:[%s0 + $0x1a] sm:$0x1]
    %v152 = vld [vmem:[%s0 + $0x1e] sm:$0x1]
    %s153 = scalar_lea.vmem %s1, 64
    %v154 = vld [vmem:[%s153] sm:$0xff]
    %v155 = vld [vmem:[%s153 + $0x8] sm:$0xff]
    %v156 = vld [vmem:[%s153 + $0x10] sm:$0xff]
    %v157 = vld [vmem:[%s153 + $0x18] sm:$0xff]
    %s158 = scalar_lea.vmem %s2, 2
    %v159 = vld [vmem:[%s158] sm:$0x1]
    %v161 = vperm.slane %v159, 0
    %v171 = vrot.slane %v146, 7
    %v172 = vsel %vm40, %v171, %v145
    %v173 = vrot.slane %v147, 6
    %v174 = vsel %vm43, %v173, %v172
    %v175 = vrot.slane %v148, 5
    %v176 = vsel %vm46, %v175, %v174
    %v177 = vrot.slane %v149, 4
    %v178 = vsel %vm49, %v177, %v176
    %v179 = vrot.slane %v150, 3
    %v180 = vsel %vm52, %v179, %v178
    %v181 = vrot.slane %v151, 2
    %v182 = vsel %vm55, %v181, %v180
    %v183 = vrot.slane %v152, 1
    %v184 = vsel %vm58, %v183, %v182
    %v185 = vsel %vm60, %v184, 0
    %187 = vmatpush.msra.mxu0 0.0
    %188 = vmatpush.msra.mxu0 0.0
    %189 = vmatpush.msra.mxu0 0.0
    %190 = vmatpush.msra.mxu0 0.0
    %191 = vmatpush.msra.mxu0 0.0
    %192 = vmatpush.msra.mxu0 0.0
    %193 = vmatpush.msra.mxu0 0.0
    %194 = vmatpush.msra.mxu0 0.0
    %195 = vmatpush.msra.mxu0 0.0
    %196 = vmatpush.msra.mxu0 0.0
    %197 = vmatpush.msra.mxu0 0.0
    %198 = vmatpush.msra.mxu0 0.0
    %199 = vmatpush.msra.mxu0 %v157
    %200 = vmatpush.msra.mxu0 %v156
    %201 = vmatpush.msra.mxu0 %v155
    %202 = vmatpush.msra.mxu0 %v154
    %203 = vmatmul.f32.gmra.mxu0 %v185
    %v204 = vpop.f32.mrf.mxu0
    %v205 = vadd.f32 %v161, %v204
    %206 = vdwg.mxu0
    %208 = vrot.lane.b32.xlu0 %v143, 16
    %v209 = vpop.permute.xlu0 %208
    %212 = vrot.lane.b32.xlu0 %v205, 32
    %v213 = vpop.permute.xlu0 %212
    %vm215 = vcmask 130048
    %v216 = vsel %vm215, %v81, %v209
    %v217 = vsel %vm60, %v216, %v213
    %vm218 = vcmask 392192
    %219 = vst.msk [vmem:[#allocation2] sm:$0xff] %vm218, %v217
    // Predicated region
    $region14: #{tpu_custom_call.1} parent=1 // pred_check
      _
    $region15: #{tpu_custom_call.1} parent=1 // pred_check_branch
      %221 = sbr.rel (0) target = $region17
    $region16: #{tpu_custom_call.1} parent=1 // pred_region
      %223 = vsyncadd [#allocation3], 0
      %s225 = sshll.u32 [#allocation2], 4
      %s226 = int_to_ptr.vmem [resolvable:$true] %s225
      %s227 = sshll.u32 %s3, 4
      %s228 = int_to_ptr.hbm [resolvable:$true] %s227
      %230 = dma.vmem_to_hbm [thread:$0]  %s226, 128, %s228, [#allocation3]
    $region17: #{tpu_custom_call.1} parent=1 // pred_fallthru
      _
    // Predicated region
    $region18: #{tpu_custom_call.1} parent=1 // pred_check
      _
    $region19: #{tpu_custom_call.1} parent=1 // pred_check_branch
      %232 = sbr.rel (0) target = $region21
    $region20: #{tpu_custom_call.1} parent=1 // pred_region
      %234 = dma.done [#allocation3], 128
    $region21: #{tpu_custom_call.1} parent=1 // pred_fallthru
      _
    %235 = vsyncpa [#allocation3], 1

</llo_original>
